<compile_context>
chip_gen: v6e
topology: v6e:2x2x1
jax: 0.10.0
libtpu: 0.0.40
codegen_flags: <defaults>
</compile_context>

<pallas_src>
import functools

import jax
import jax.numpy as jnp
import numpy as np
from jax.experimental import pallas as pl
from jax.experimental.pallas import tpu as pltpu


def _round_up(x, m):
    return (x + m - 1) // m * m


def _device_kind():
    try:
        return jax.devices()[0].device_kind.lower()
    except Exception:
        return ""


def _vmem_capacity_bytes():
    try:
        return int(pltpu.get_tpu_info().vmem_capacity_bytes)
    except Exception:
        return 64 << 20  # conservative (v7x per-core physical VMEM)


def _cate_emb_kernel(idx_ref, w_ref, out_ref, *, chunk_feats, acc_dtype):
    # idx_ref: (TILE_B, NF)     int32 — indices already offset into combined row space
    # w_ref:   (R_pad, E_pad)   bf16  — combined (block-diagonal) embedding weight
    # out_ref: (TILE_B, E_pad)  bf16
    idx = idx_ref[...]                                   # (B, NF)
    b, nf = idx.shape

    one = jnp.ones((), dtype=acc_dtype)                  # hoisted select constant
    base_iota = jax.lax.broadcasted_iota(jnp.int32, (b, 128), 1)   # lanes fast axis
    idx_cols = [idx[:, f:f + 1] for f in range(nf)]      # (B, 1) columns, hoisted

    # Build the multi-hot matrix chunk-by-chunk (128 lanes per chunk).  Each
    # feature is only compared inside the statically known chunks its row block
    # [row_off_f, row_off_f + card_f) touches.  Row blocks are disjoint across
    # features, so where(cond, 1, chunk) never clobbers another feature's hit.
    chunks = []
    for c, feats in enumerate(chunk_feats):
        chunk_iota = base_iota + (128 * c)
        chunk = jnp.zeros((b, 128), dtype=acc_dtype)
        for f in feats:
            chunk = jnp.where(chunk_iota == idx_cols[f], one, chunk)
        chunks.append(chunk)
    multi_hot = chunks[0] if len(chunks) == 1 else jnp.concatenate(chunks, axis=1)

    # bf16 MXU operands (multi-hot is exactly 0/1 -> lossless), f32 accumulate.
    # Each output column receives exactly one nonzero term, so the bf16 store
    # is lossless as well.
    acc = jnp.dot(multi_hot.astype(jnp.bfloat16), w_ref[...],
                  preferred_element_type=jnp.float32)
    out_ref[...] = acc.astype(out_ref.dtype)


class CateEmbPallas:
    """JAX/Pallas port of the PyTorch CateEmb module (inference semantics)."""

    def __init__(self, emb_dims, dropout, key, out_dtype=jnp.bfloat16):
        # Same sizing rule as the PyTorch __init__.
        emb_dims = [(x, min(50, round(1.6 * x ** 0.56))) for x in emb_dims]
        self.emb_dims = emb_dims
        self.dropout = dropout                      # identity in eval mode
        self.out_dtype = out_dtype
        self.n_emb = sum(y for _, y in emb_dims)

        cards = [c for c, _ in emb_dims]
        dims = [d for _, d in emb_dims]
        self.cards = np.asarray(cards, dtype=np.int32)
        self.row_offsets = np.concatenate([[0], np.cumsum(cards)[:-1]]).astype(np.int32)
        col_offsets = np.concatenate([[0], np.cumsum(dims)[:-1]]).astype(np.int32)
        self.total_rows = int(sum(cards))

        # Per-table weights, N(0, 1) like nn.Embedding default init.
        keys = jax.random.split(key, len(emb_dims))
        self.tables = [jax.random.normal(k, (c, d), dtype=jnp.float32)
                       for k, (c, d) in zip(keys, emb_dims)]

        # Pack into one padded block-diagonal weight matrix (MXU-aligned), bf16.
        self.r_pad = _round_up(self.total_rows, 128)
        self.e_pad = _round_up(self.n_emb, 128)
        w = np.zeros((self.r_pad, self.e_pad), dtype=np.float32)
        for t, ro, co, (c, d) in zip(self.tables, self.row_offsets, col_offsets, emb_dims):
            w[ro:ro + c, co:co + d] = np.asarray(t)
        self.w_packed = jnp.asarray(w, dtype=jnp.bfloat16)

        # Static 128-lane chunk -> intersecting features map (for the slab-
        # restricted multi-hot build).
        n_chunks = self.r_pad // 128
        chunk_feats = []
        for c in range(n_chunks):
            lo, hi = c * 128, (c + 1) * 128
            feats = tuple(f for f, (ro, card) in enumerate(zip(self.row_offsets, cards))
                          if ro < hi and ro + card > lo)
            chunk_feats.append(feats)
        self.chunk_feats = tuple(chunk_feats)

    def __call__(self, x):
        # x: [batch, num_features] int32
        batch, nf = x.shape
        assert nf == len(self.emb_dims)

        # ---- generation-aware static config ------------------------------
        kind = _device_kind()
        newer_gen = ("v6" in kind) or ("v7" in kind)     # bf16 VALU + 256x256 MXU
        acc_dtype = jnp.bfloat16 if newer_gen else jnp.float32
        base_tile = 256 if newer_gen else 128
        want_two_steps = "v7" in kind                    # 2 TCs share the parallel grid

        b128 = _round_up(max(batch, 1), 128)
        tile_b = min(base_tile, b128)
        if want_two_steps and b128 >= 256:
            tile_b = min(tile_b, _round_up(b128 // 2, 128))
        tile_b = max(128, tile_b)

        # ---- VMEM budget (always explicit, capped at physical) ----------
        cap = _vmem_capacity_bytes()
        headroom = 4 << 20
        w_bytes = self.r_pad * self.e_pad * 2            # bf16
        acc_itemsize = 4 if acc_dtype == jnp.float32 else 2

        def tile_budget(tb):
            idx_bytes = tb * nf * 4
            out_bytes = tb * self.e_pad * 2              # bf16 output tile
            mh_bytes = tb * self.r_pad * acc_itemsize    # in-register/VMEM intermediate
            # Budget W at 2 buffers: Pallas may double-buffer inputs even with a
            # constant index_map.
            return 2 * w_bytes + 2 * (idx_bytes + out_bytes) + mh_bytes + (2 << 20)

        while tile_b > 128 and tile_budget(tile_b) > cap - headroom:
            tile_b //= 2
        tile_b = max(128, _round_up(tile_b, 128))
        needed = tile_budget(tile_b)
        if needed > cap - headroom:
            # TODO(synk): HBM-resident gather path for packed tables that exceed VMEM.
            raise NotImplementedError(
                "packed embedding table does not fit VMEM; gather path not implemented")
        vmem_limit = int(min(max(needed * 5 // 4, 16 << 20), cap - headroom))

        b_pad = _round_up(max(batch, tile_b), tile_b)
        grid = (b_pad // tile_b,)

        # ---- index preprocessing ----------------------------------------
        # Clip out-of-range indices into each table (nn.Embedding would error;
        # clipping avoids silently reading a neighboring table's rows).
        x = jnp.clip(x.astype(jnp.int32), 0, jnp.asarray(self.cards)[None, :] - 1)
        x_off = x + jnp.asarray(self.row_offsets)[None, :]
        # Padded batch rows index row 0 of every table; they are sliced off below.
        x_off = jnp.pad(x_off, ((0, b_pad - batch), (0, 0)))

        cost = pl.CostEstimate(
            flops=2 * b_pad * self.r_pad * self.e_pad,
            transcendentals=0,
            bytes_accessed=w_bytes + b_pad * nf * 4 + b_pad * self.e_pad * 2,
        )

        kernel = functools.partial(_cate_emb_kernel,
                                   chunk_feats=self.chunk_feats,
                                   acc_dtype=acc_dtype)

        out = pl.pallas_call(
            kernel,
            out_shape=jax.ShapeDtypeStruct((b_pad, self.e_pad), jnp.bfloat16),
            grid=grid,
            in_specs=[
                pl.BlockSpec((tile_b, nf), lambda i: (i, 0)),               # batch tile of indices
                pl.BlockSpec((self.r_pad, self.e_pad), lambda i: (0, 0)),   # W resident across grid
            ],
            out_specs=pl.BlockSpec((tile_b, self.e_pad), lambda i: (i, 0)),
            compiler_params=pltpu.CompilerParams(
                dimension_semantics=("parallel",),
                vmem_limit_bytes=vmem_limit,
            ),
            cost_estimate=cost,
        )(x_off, self.w_packed)

        # Dropout is identity at inference.
        out = out[:batch, :self.n_emb]
        if self.out_dtype != jnp.bfloat16:
            out = out.astype(self.out_dtype)
        return out


if __name__ == "__main__":
    key = jax.random.PRNGKey(0)
    k_w, k_x = jax.random.split(key)

    cardinalities = [11, 7, 25, 5]          # per-feature vocabulary sizes
    module = CateEmbPallas(cardinalities, dropout=0.1, key=k_w)

    batch = 6
    cols = [jax.random.randint(jax.random.fold_in(k_x, i), (batch, 1), 0, c, dtype=jnp.int32)
            for i, c in enumerate(cardinalities)]
    x = jnp.concatenate(cols, axis=1)        # [batch, num_features] int32

    out = jax.block_until_ready(module(x))

    # Pure-JAX reference: per-table gather + concat on the bf16-rounded tables.
    # The kernel's 0/1 x bf16 matmul (f32 accumulate, bf16 store) is exact w.r.t. these.
    tables_bf16 = [t.astype(jnp.bfloat16).astype(jnp.float32) for t in module.tables]
    ref = jnp.concatenate([t[x[:, i]] for i, t in enumerate(tables_bf16)], axis=1)

    assert out.shape == (batch, module.n_emb), out.shape
    assert jnp.allclose(out.astype(jnp.float32), ref, atol=1e-5, rtol=1e-5), \
        "mismatch vs reference"
    print("KERNEL_OK")
</pallas_src>

<mosaic_0001>
module attributes {stable_mosaic.version = 11 : i64} {
  func.func @_cate_emb_kernel(%arg0: i32, %arg1: memref<128x4xi32, #tpu.memory_space<vmem>>, %arg2: memref<128x128xbf16, #tpu.memory_space<vmem>>, %arg3: memref<128x128xbf16, #tpu.memory_space<vmem>>) attributes {dimension_semantics = [#tpu.dimension_semantics<parallel>], iteration_bounds = array<i64: 1>, scalar_prefetch = 0 : i64, scratch_operands = 0 : i64, tpu.core_type = #tpu.core_type<tc>, window_params = [{transform_indices = @transform_0, window_bounds = array<i64: 128, 4>}, {pipeline_mode = #tpu.pipeline_mode<synchronous>, transform_indices = @transform_1, window_bounds = array<i64: 128, 128>}, {transform_indices = @transform_2, window_bounds = array<i64: 128, 128>}]} {
    %c0 = arith.constant 0 : index
    %c0_0 = arith.constant 0 : index
    %0 = vector.load %arg1[%c0, %c0_0] : memref<128x4xi32, #tpu.memory_space<vmem>>, vector<128x4xi32>
    %1 = tpu.iota {dimensions = array<i32: 1>} : vector<128x128xi32>
    %2 = vector.extract_strided_slice %0 {offsets = [0, 0], sizes = [128, 1], strides = [1, 1]} : vector<128x4xi32> to vector<128x1xi32>
    %3 = vector.extract_strided_slice %0 {offsets = [0, 1], sizes = [128, 1], strides = [1, 1]} : vector<128x4xi32> to vector<128x1xi32>
    %4 = vector.extract_strided_slice %0 {offsets = [0, 2], sizes = [128, 1], strides = [1, 1]} : vector<128x4xi32> to vector<128x1xi32>
    %5 = vector.extract_strided_slice %0 {offsets = [0, 3], sizes = [128, 1], strides = [1, 1]} : vector<128x4xi32> to vector<128x1xi32>
    %c0_i32 = arith.constant 0 : i32
    %6 = vector.broadcast %c0_i32 : i32 to vector<128x128xi32>
    %7 = arith.addi %1, %6 : vector<128x128xi32>
    %cst = arith.constant 0.000000e+00 : f32
    %8 = vector.broadcast %cst : f32 to vector<128x128xf32>
    %9 = vector.broadcast %2 : vector<128x1xi32> to vector<128x128xi32>
    %10 = arith.cmpi eq, %7, %9 : vector<128x128xi32>
    %cst_1 = arith.constant 1.000000e+00 : f32
    %11 = vector.broadcast %cst_1 : f32 to vector<128x128xf32>
    %12 = arith.select %10, %11, %8 : vector<128x128xi1>, vector<128x128xf32>
    %13 = vector.broadcast %3 : vector<128x1xi32> to vector<128x128xi32>
    %14 = arith.cmpi eq, %7, %13 : vector<128x128xi32>
    %cst_2 = arith.constant 1.000000e+00 : f32
    %15 = vector.broadcast %cst_2 : f32 to vector<128x128xf32>
    %16 = arith.select %14, %15, %12 : vector<128x128xi1>, vector<128x128xf32>
    %17 = vector.broadcast %4 : vector<128x1xi32> to vector<128x128xi32>
    %18 = arith.cmpi eq, %7, %17 : vector<128x128xi32>
    %cst_3 = arith.constant 1.000000e+00 : f32
    %19 = vector.broadcast %cst_3 : f32 to vector<128x128xf32>
    %20 = arith.select %18, %19, %16 : vector<128x128xi1>, vector<128x128xf32>
    %21 = vector.broadcast %5 : vector<128x1xi32> to vector<128x128xi32>
    %22 = arith.cmpi eq, %7, %21 : vector<128x128xi32>
    %cst_4 = arith.constant 1.000000e+00 : f32
    %23 = vector.broadcast %cst_4 : f32 to vector<128x128xf32>
    %24 = arith.select %22, %23, %20 : vector<128x128xi1>, vector<128x128xf32>
    %25 = arith.truncf %24 : vector<128x128xf32> to vector<128x128xbf16>
    %c0_5 = arith.constant 0 : index
    %c0_6 = arith.constant 0 : index
    %26 = vector.load %arg2[%c0_5, %c0_6] : memref<128x128xbf16, #tpu.memory_space<vmem>>, vector<128x128xbf16>
    %cst_7 = arith.constant dense<0.000000e+00> : vector<128x128xf32>
    %27 = tpu.matmul %25, %26, %cst_7 {dimension_numbers = #tpu.dot_dimension_numbers<[1], [0], [0], [1], [0, 0, 1, 1], [], []>} : vector<128x128xbf16>, vector<128x128xbf16>, vector<128x128xf32> -> vector<128x128xf32>
    %28 = arith.truncf %27 : vector<128x128xf32> to vector<128x128xbf16>
    %c0_8 = arith.constant 0 : index
    %c0_9 = arith.constant 0 : index
    %29 = vector.load %arg3[%c0_8, %c0_9] : memref<128x128xbf16, #tpu.memory_space<vmem>>, vector<128x128xbf16>
    tpu.vector_store %arg3[%c0_8, %c0_9], %28 {strides = array<i32>} : memref<128x128xbf16, #tpu.memory_space<vmem>>, vector<128x128xbf16>,
    return
  }
  func.func @transform_0(%arg0: i32) -> (i32, i32) {
    %c0_i32 = arith.constant 0 : i32
    %c0_i32_0 = arith.constant 0 : i32
    return %arg0, %c0_i32 : i32, i32
  }
  func.func @transform_1(%arg0: i32) -> (i32, i32) {
    %c0_i32 = arith.constant 0 : i32
    %c0_i32_0 = arith.constant 0 : i32
    %c0_i32_1 = arith.constant 0 : i32
    return %c0_i32, %c0_i32_0 : i32, i32
  }
  func.func @transform_2(%arg0: i32) -> (i32, i32) {
    %c0_i32 = arith.constant 0 : i32
    %c0_i32_0 = arith.constant 0 : i32
    return %arg0, %c0_i32 : i32, i32
  }
}

</mosaic_0001>

<llo_original>
// kernel: tpu_custom_call.1
$region0: #{tpu_custom_call.1}
  #allocation0 [shape = 'u32[]', space=smem, size = 0x4, offset = 0x4, fixed_abs, tag = 'smem constant byte address 0x4 - core index']
  #allocation1 [shape = 'u32[144,128]{1,0:T(1,128)}', space=vmem, size = 0x12000, scoped, tag = 'internal scratch']
  %s0 = inlined_call_operand.vmem [shape: s32[128,4], index: 0, kind: input, shape index: {}]
  %s1 = inlined_call_operand.vmem [shape: bf16[128,128], index: 1, kind: input, shape index: {}]
  %s2 = inlined_call_operand.hbm [shape: bf16[128,128], index: 2, kind: output, shape index: {}]
  %s3 = sld [smem:[#allocation0]]
  $region18: #{tpu_custom_call.1} parent=0
    _
  %s5 = ssub.s32 1, %s3
  %s6 = scalar_select 0, %s5, %s3
  $region1: #{tpu_custom_call.1} parent=0
    #allocation2 [shape = 'u8[32768]{0}', space=vmem, size = 0x8000, scoped, tag = 'output window, operand 0, single buffered']
    #allocation3 [shape = 's32[1]{0}', space=sflag, size = 0x4, scoped, tag = 'scoped memory for tpu_custom_call.1']
    %7 = vsyncpa [#allocation3], 0
    // Predicated region
    $region2: #{tpu_custom_call.1} parent=1 // pred_check
      _
    $region3: #{tpu_custom_call.1} parent=1 // pred_check_branch
      %9 = sbr.rel (0) target = $region5
    $region4: #{tpu_custom_call.1} parent=1 // pred_region
      _
    $region5: #{tpu_custom_call.1} parent=1 // pred_fallthru
      _
    // Predicated region
    $region6: #{tpu_custom_call.1} parent=1 // pred_check
      _
    $region7: #{tpu_custom_call.1} parent=1 // pred_check_branch
      %11 = sbr.rel (0) target = $region9
    $region8: #{tpu_custom_call.1} parent=1 // pred_region
      _
    $region9: #{tpu_custom_call.1} parent=1 // pred_fallthru
      _
    %v13 = vld [vmem:[%s0] sm:$0xff]
    %v14 = vld [vmem:[%s0 + $0x8] sm:$0xff]
    %v15 = vld [vmem:[%s0 + $0x10] sm:$0xff]
    %v16 = vld [vmem:[%s0 + $0x18] sm:$0xff]
    %v17 = vld [vmem:[%s0 + $0x20] sm:$0xff]
    %v18 = vld [vmem:[%s0 + $0x28] sm:$0xff]
    %v19 = vld [vmem:[%s0 + $0x30] sm:$0xff]
    %v20 = vld [vmem:[%s0 + $0x38] sm:$0xff]
    %v21 = vld [vmem:[%s0 + $0x40] sm:$0xff]
    %v22 = vld [vmem:[%s0 + $0x48] sm:$0xff]
    %v23 = vld [vmem:[%s0 + $0x50] sm:$0xff]
    %v24 = vld [vmem:[%s0 + $0x58] sm:$0xff]
    %v25 = vld [vmem:[%s0 + $0x60] sm:$0xff]
    %v26 = vld [vmem:[%s0 + $0x68] sm:$0xff]
    %v27 = vld [vmem:[%s0 + $0x70] sm:$0xff]
    %v28 = vld [vmem:[%s0 + $0x78] sm:$0xff]
    %v29 = vlaneseq
    %v30 = vand.u32 %v29, 127
    %31 = vset.pattern.permute.xlu0 0
    %32 = vperm.xlu0 %31, %v13
    %v33 = vpop.permute.xlu0 %32
    %34 = vset.pattern.permute.xlu0 0
    %35 = vperm.xlu0 %34, %v14
    %v36 = vpop.permute.xlu0 %35
    %37 = vset.pattern.permute.xlu0 0
    %38 = vperm.xlu0 %37, %v15
    %v39 = vpop.permute.xlu0 %38
    %40 = vset.pattern.permute.xlu0 0
    %41 = vperm.xlu0 %40, %v16
    %v42 = vpop.permute.xlu0 %41
    %43 = vset.pattern.permute.xlu0 0
    %44 = vperm.xlu0 %43, %v17
    %v45 = vpop.permute.xlu0 %44
    %46 = vset.pattern.permute.xlu0 0
    %47 = vperm.xlu0 %46, %v18
    %v48 = vpop.permute.xlu0 %47
    %49 = vset.pattern.permute.xlu0 0
    %50 = vperm.xlu0 %49, %v19
    %v51 = vpop.permute.xlu0 %50
    %52 = vset.pattern.permute.xlu0 0
    %53 = vperm.xlu0 %52, %v20
    %v54 = vpop.permute.xlu0 %53
    %55 = vset.pattern.permute.xlu0 0
    %56 = vperm.xlu0 %55, %v21
    %v57 = vpop.permute.xlu0 %56
    %58 = vset.pattern.permute.xlu0 0
    %59 = vperm.xlu0 %58, %v22
    %v60 = vpop.permute.xlu0 %59
    %61 = vset.pattern.permute.xlu0 0
    %62 = vperm.xlu0 %61, %v23
    %v63 = vpop.permute.xlu0 %62
    %64 = vset.pattern.permute.xlu0 0
    %65 = vperm.xlu0 %64, %v24
    %v66 = vpop.permute.xlu0 %65
    %67 = vset.pattern.permute.xlu0 0
    %68 = vperm.xlu0 %67, %v25
    %v69 = vpop.permute.xlu0 %68
    %70 = vset.pattern.permute.xlu0 0
    %71 = vperm.xlu0 %70, %v26
    %v72 = vpop.permute.xlu0 %71
    %73 = vset.pattern.permute.xlu0 0
    %74 = vperm.xlu0 %73, %v27
    %v75 = vpop.permute.xlu0 %74
    %76 = vset.pattern.permute.xlu0 0
    %77 = vperm.xlu0 %76, %v28
    %v78 = vpop.permute.xlu0 %77
    %vm79 = vcmp.eq.s32.totalorder %v30, %v33
    %vm80 = vcmp.eq.s32.totalorder %v30, %v36
    %vm81 = vcmp.eq.s32.totalorder %v30, %v39
    %vm82 = vcmp.eq.s32.totalorder %v30, %v42
    %vm83 = vcmp.eq.s32.totalorder %v30, %v45
    %vm84 = vcmp.eq.s32.totalorder %v30, %v48
    %vm85 = vcmp.eq.s32.totalorder %v30, %v51
    %vm86 = vcmp.eq.s32.totalorder %v30, %v54
    %vm87 = vcmp.eq.s32.totalorder %v30, %v57
    %vm88 = vcmp.eq.s32.totalorder %v30, %v60
    %vm89 = vcmp.eq.s32.totalorder %v30, %v63
    %vm90 = vcmp.eq.s32.totalorder %v30, %v66
    %vm91 = vcmp.eq.s32.totalorder %v30, %v69
    %vm92 = vcmp.eq.s32.totalorder %v30, %v72
    %vm93 = vcmp.eq.s32.totalorder %v30, %v75
    %vm94 = vcmp.eq.s32.totalorder %v30, %v78
    %v95 = vsel %vm79, 1.0, 0.0
    %v96 = vsel %vm80, 1.0, 0.0
    %v97 = vsel %vm81, 1.0, 0.0
    %v98 = vsel %vm82, 1.0, 0.0
    %v99 = vsel %vm83, 1.0, 0.0
    %v100 = vsel %vm84, 1.0, 0.0
    %v101 = vsel %vm85, 1.0, 0.0
    %v102 = vsel %vm86, 1.0, 0.0
    %v103 = vsel %vm87, 1.0, 0.0
    %v104 = vsel %vm88, 1.0, 0.0
    %v105 = vsel %vm89, 1.0, 0.0
    %v106 = vsel %vm90, 1.0, 0.0
    %v107 = vsel %vm91, 1.0, 0.0
    %v108 = vsel %vm92, 1.0, 0.0
    %v109 = vsel %vm93, 1.0, 0.0
    %v110 = vsel %vm94, 1.0, 0.0
    %111 = vset.pattern.permute.xlu0 1
    %112 = vperm.xlu0 %111, %v13
    %v113 = vpop.permute.xlu0 %112
    %114 = vset.pattern.permute.xlu0 1
    %115 = vperm.xlu0 %114, %v14
    %v116 = vpop.permute.xlu0 %115
    %117 = vset.pattern.permute.xlu0 1
    %118 = vperm.xlu0 %117, %v15
    %v119 = vpop.permute.xlu0 %118
    %120 = vset.pattern.permute.xlu0 1
    %121 = vperm.xlu0 %120, %v16
    %v122 = vpop.permute.xlu0 %121
    %123 = vset.pattern.permute.xlu0 1
    %124 = vperm.xlu0 %123, %v17
    %v125 = vpop.permute.xlu0 %124
    %126 = vset.pattern.permute.xlu0 1
    %127 = vperm.xlu0 %126, %v18
    %v128 = vpop.permute.xlu0 %127
    %129 = vset.pattern.permute.xlu0 1
    %130 = vperm.xlu0 %129, %v19
    %v131 = vpop.permute.xlu0 %130
    %132 = vset.pattern.permute.xlu0 1
    %133 = vperm.xlu0 %132, %v20
    %v134 = vpop.permute.xlu0 %133
    %135 = vset.pattern.permute.xlu0 1
    %136 = vperm.xlu0 %135, %v21
    %v137 = vpop.permute.xlu0 %136
    %138 = vset.pattern.permute.xlu0 1
    %139 = vperm.xlu0 %138, %v22
    %v140 = vpop.permute.xlu0 %139
    %141 = vset.pattern.permute.xlu0 1
    %142 = vperm.xlu0 %141, %v23
    %v143 = vpop.permute.xlu0 %142
    %144 = vset.pattern.permute.xlu0 1
    %145 = vperm.xlu0 %144, %v24
    %v146 = vpop.permute.xlu0 %145
    %147 = vset.pattern.permute.xlu0 1
    %148 = vperm.xlu0 %147, %v25
    %v149 = vpop.permute.xlu0 %148
    %150 = vset.pattern.permute.xlu0 1
    %151 = vperm.xlu0 %150, %v26
    %v152 = vpop.permute.xlu0 %151
    %153 = vset.pattern.permute.xlu0 1
    %154 = vperm.xlu0 %153, %v27
    %v155 = vpop.permute.xlu0 %154
    %156 = vset.pattern.permute.xlu0 1
    %157 = vperm.xlu0 %156, %v28
    %v158 = vpop.permute.xlu0 %157
    %vm159 = vcmp.eq.s32.totalorder %v30, %v113
    %vm160 = vcmp.eq.s32.totalorder %v30, %v116
    %vm161 = vcmp.eq.s32.totalorder %v30, %v119
    %vm162 = vcmp.eq.s32.totalorder %v30, %v122
    %vm163 = vcmp.eq.s32.totalorder %v30, %v125
    %vm164 = vcmp.eq.s32.totalorder %v30, %v128
    %vm165 = vcmp.eq.s32.totalorder %v30, %v131
    %vm166 = vcmp.eq.s32.totalorder %v30, %v134
    %vm167 = vcmp.eq.s32.totalorder %v30, %v137
    %vm168 = vcmp.eq.s32.totalorder %v30, %v140
    %vm169 = vcmp.eq.s32.totalorder %v30, %v143
    %vm170 = vcmp.eq.s32.totalorder %v30, %v146
    %vm171 = vcmp.eq.s32.totalorder %v30, %v149
    %vm172 = vcmp.eq.s32.totalorder %v30, %v152
    %vm173 = vcmp.eq.s32.totalorder %v30, %v155
    %vm174 = vcmp.eq.s32.totalorder %v30, %v158
    %v175 = vsel %vm159, 1.0, %v95
    %v176 = vsel %vm160, 1.0, %v96
    %v177 = vsel %vm161, 1.0, %v97
    %v178 = vsel %vm162, 1.0, %v98
    %v179 = vsel %vm163, 1.0, %v99
    %v180 = vsel %vm164, 1.0, %v100
    %v181 = vsel %vm165, 1.0, %v101
    %v182 = vsel %vm166, 1.0, %v102
    %v183 = vsel %vm167, 1.0, %v103
    %v184 = vsel %vm168, 1.0, %v104
    %v185 = vsel %vm169, 1.0, %v105
    %v186 = vsel %vm170, 1.0, %v106
    %v187 = vsel %vm171, 1.0, %v107
    %v188 = vsel %vm172, 1.0, %v108
    %v189 = vsel %vm173, 1.0, %v109
    %v190 = vsel %vm174, 1.0, %v110
    %191 = vset.pattern.permute.xlu0 2
    %192 = vperm.xlu0 %191, %v13
    %v193 = vpop.permute.xlu0 %192
    %194 = vset.pattern.permute.xlu0 2
    %195 = vperm.xlu0 %194, %v14
    %v196 = vpop.permute.xlu0 %195
    %197 = vset.pattern.permute.xlu0 2
    %198 = vperm.xlu0 %197, %v15
    %v199 = vpop.permute.xlu0 %198
    %200 = vset.pattern.permute.xlu0 2
    %201 = vperm.xlu0 %200, %v16
    %v202 = vpop.permute.xlu0 %201
    %203 = vset.pattern.permute.xlu0 2
    %204 = vperm.xlu0 %203, %v17
    %v205 = vpop.permute.xlu0 %204
    %206 = vset.pattern.permute.xlu0 2
    %207 = vperm.xlu0 %206, %v18
    %v208 = vpop.permute.xlu0 %207
    %209 = vset.pattern.permute.xlu0 2
    %210 = vperm.xlu0 %209, %v19
    %v211 = vpop.permute.xlu0 %210
    %212 = vset.pattern.permute.xlu0 2
    %213 = vperm.xlu0 %212, %v20
    %v214 = vpop.permute.xlu0 %213
    %215 = vset.pattern.permute.xlu0 2
    %216 = vperm.xlu0 %215, %v21
    %v217 = vpop.permute.xlu0 %216
    %218 = vset.pattern.permute.xlu0 2
    %219 = vperm.xlu0 %218, %v22
    %v220 = vpop.permute.xlu0 %219
    %221 = vset.pattern.permute.xlu0 2
    %222 = vperm.xlu0 %221, %v23
    %v223 = vpop.permute.xlu0 %222
    %224 = vset.pattern.permute.xlu0 2
    %225 = vperm.xlu0 %224, %v24
    %v226 = vpop.permute.xlu0 %225
    %227 = vset.pattern.permute.xlu0 2
    %228 = vperm.xlu0 %227, %v25
    %v229 = vpop.permute.xlu0 %228
    %230 = vset.pattern.permute.xlu0 2
    %231 = vperm.xlu0 %230, %v26
    %v232 = vpop.permute.xlu0 %231
    %233 = vset.pattern.permute.xlu0 2
    %234 = vperm.xlu0 %233, %v27
    %v235 = vpop.permute.xlu0 %234
    %236 = vset.pattern.permute.xlu0 2
    %237 = vperm.xlu0 %236, %v28
    %v238 = vpop.permute.xlu0 %237
    %vm239 = vcmp.eq.s32.totalorder %v30, %v193
    %vm240 = vcmp.eq.s32.totalorder %v30, %v196
    %vm241 = vcmp.eq.s32.totalorder %v30, %v199
    %vm242 = vcmp.eq.s32.totalorder %v30, %v202
    %vm243 = vcmp.eq.s32.totalorder %v30, %v205
    %vm244 = vcmp.eq.s32.totalorder %v30, %v208
    %vm245 = vcmp.eq.s32.totalorder %v30, %v211
    %vm246 = vcmp.eq.s32.totalorder %v30, %v214
    %vm247 = vcmp.eq.s32.totalorder %v30, %v217
    %vm248 = vcmp.eq.s32.totalorder %v30, %v220
    %vm249 = vcmp.eq.s32.totalorder %v30, %v223
    %vm250 = vcmp.eq.s32.totalorder %v30, %v226
    %vm251 = vcmp.eq.s32.totalorder %v30, %v229
    %vm252 = vcmp.eq.s32.totalorder %v30, %v232
    %vm253 = vcmp.eq.s32.totalorder %v30, %v235
    %vm254 = vcmp.eq.s32.totalorder %v30, %v238
    %v255 = vsel %vm239, 1.0, %v175
    %v256 = vsel %vm240, 1.0, %v176
    %v257 = vsel %vm241, 1.0, %v177
    %v258 = vsel %vm242, 1.0, %v178
    %v259 = vsel %vm243, 1.0, %v179
    %v260 = vsel %vm244, 1.0, %v180
    %v261 = vsel %vm245, 1.0, %v181
    %v262 = vsel %vm246, 1.0, %v182
    %v263 = vsel %vm247, 1.0, %v183
    %v264 = vsel %vm248, 1.0, %v184
    %v265 = vsel %vm249, 1.0, %v185
    %v266 = vsel %vm250, 1.0, %v186
    %v267 = vsel %vm251, 1.0, %v187
    %v268 = vsel %vm252, 1.0, %v188
    %v269 = vsel %vm253, 1.0, %v189
    %v270 = vsel %vm254, 1.0, %v190
    %271 = vset.pattern.permute.xlu0 3
    %272 = vperm.xlu0 %271, %v13
    %v273 = vpop.permute.xlu0 %272
    %274 = vset.pattern.permute.xlu0 3
    %275 = vperm.xlu0 %274, %v14
    %v276 = vpop.permute.xlu0 %275
    %277 = vset.pattern.permute.xlu0 3
    %278 = vperm.xlu0 %277, %v15
    %v279 = vpop.permute.xlu0 %278
    %280 = vset.pattern.permute.xlu0 3
    %281 = vperm.xlu0 %280, %v16
    %v282 = vpop.permute.xlu0 %281
    %283 = vset.pattern.permute.xlu0 3
    %284 = vperm.xlu0 %283, %v17
    %v285 = vpop.permute.xlu0 %284
    %286 = vset.pattern.permute.xlu0 3
    %287 = vperm.xlu0 %286, %v18
    %v288 = vpop.permute.xlu0 %287
    %289 = vset.pattern.permute.xlu0 3
    %290 = vperm.xlu0 %289, %v19
    %v291 = vpop.permute.xlu0 %290
    %292 = vset.pattern.permute.xlu0 3
    %293 = vperm.xlu0 %292, %v20
    %v294 = vpop.permute.xlu0 %293
    %295 = vset.pattern.permute.xlu0 3
    %296 = vperm.xlu0 %295, %v21
    %v297 = vpop.permute.xlu0 %296
    %298 = vset.pattern.permute.xlu0 3
    %299 = vperm.xlu0 %298, %v22
    %v300 = vpop.permute.xlu0 %299
    %301 = vset.pattern.permute.xlu0 3
    %302 = vperm.xlu0 %301, %v23
    %v303 = vpop.permute.xlu0 %302
    %304 = vset.pattern.permute.xlu0 3
    %305 = vperm.xlu0 %304, %v24
    %v306 = vpop.permute.xlu0 %305
    %307 = vset.pattern.permute.xlu0 3
    %308 = vperm.xlu0 %307, %v25
    %v309 = vpop.permute.xlu0 %308
    %310 = vset.pattern.permute.xlu0 3
    %311 = vperm.xlu0 %310, %v26
    %v312 = vpop.permute.xlu0 %311
    %313 = vset.pattern.permute.xlu0 3
    %314 = vperm.xlu0 %313, %v27
    %v315 = vpop.permute.xlu0 %314
    %316 = vset.pattern.permute.xlu0 3
    %317 = vperm.xlu0 %316, %v28
    %v318 = vpop.permute.xlu0 %317
    %vm319 = vcmp.eq.s32.totalorder %v30, %v273
    %vm320 = vcmp.eq.s32.totalorder %v30, %v276
    %vm321 = vcmp.eq.s32.totalorder %v30, %v279
    %vm322 = vcmp.eq.s32.totalorder %v30, %v282
    %vm323 = vcmp.eq.s32.totalorder %v30, %v285
    %vm324 = vcmp.eq.s32.totalorder %v30, %v288
    %vm325 = vcmp.eq.s32.totalorder %v30, %v291
    %vm326 = vcmp.eq.s32.totalorder %v30, %v294
    %vm327 = vcmp.eq.s32.totalorder %v30, %v297
    %vm328 = vcmp.eq.s32.totalorder %v30, %v300
    %vm329 = vcmp.eq.s32.totalorder %v30, %v303
    %vm330 = vcmp.eq.s32.totalorder %v30, %v306
    %vm331 = vcmp.eq.s32.totalorder %v30, %v309
    %vm332 = vcmp.eq.s32.totalorder %v30, %v312
    %vm333 = vcmp.eq.s32.totalorder %v30, %v315
    %vm334 = vcmp.eq.s32.totalorder %v30, %v318
    %v335 = vsel %vm319, 1.0, %v255
    %v336 = vsel %vm320, 1.0, %v256
    %v337 = vsel %vm321, 1.0, %v257
    %v338 = vsel %vm322, 1.0, %v258
    %v339 = vsel %vm323, 1.0, %v259
    %v340 = vsel %vm324, 1.0, %v260
    %v341 = vsel %vm325, 1.0, %v261
    %v342 = vsel %vm326, 1.0, %v262
    %v343 = vsel %vm327, 1.0, %v263
    %v344 = vsel %vm328, 1.0, %v264
    %v345 = vsel %vm329, 1.0, %v265
    %v346 = vsel %vm330, 1.0, %v266
    %v347 = vsel %vm331, 1.0, %v267
    %v348 = vsel %vm332, 1.0, %v268
    %v349 = vsel %vm333, 1.0, %v269
    %v350 = vsel %vm334, 1.0, %v270
    %v351 = vpack.c.bf16 %v336, %v335
    %v352 = vpack.c.bf16 %v338, %v337
    %v353 = vpack.c.bf16 %v340, %v339
    %v354 = vpack.c.bf16 %v342, %v341
    %v355 = vpack.c.bf16 %v344, %v343
    %v356 = vpack.c.bf16 %v346, %v345
    %v357 = vpack.c.bf16 %v348, %v347
    %v358 = vpack.c.bf16 %v350, %v349
    %v359 = vld [vmem:[%s1] sm:$0xf]
    %v360 = vld [vmem:[%s1 + $0x4] sm:$0xf]
    %v361 = vld [vmem:[%s1 + $0x8] sm:$0xf]
    %v362 = vld [vmem:[%s1 + $0xc] sm:$0xf]
    %v363 = vld [vmem:[%s1 + $0x10] sm:$0xf]
    %v364 = vld [vmem:[%s1 + $0x14] sm:$0xf]
    %v365 = vld [vmem:[%s1 + $0x18] sm:$0xf]
    %v366 = vld [vmem:[%s1 + $0x1c] sm:$0xf]
    %v367 = vld [vmem:[%s1 + $0x20] sm:$0xf]
    %v368 = vld [vmem:[%s1 + $0x24] sm:$0xf]
    %v369 = vld [vmem:[%s1 + $0x28] sm:$0xf]
    %v370 = vld [vmem:[%s1 + $0x2c] sm:$0xf]
    %v371 = vld [vmem:[%s1 + $0x30] sm:$0xf]
    %v372 = vld [vmem:[%s1 + $0x34] sm:$0xf]
    %v373 = vld [vmem:[%s1 + $0x38] sm:$0xf]
    %v374 = vld [vmem:[%s1 + $0x3c] sm:$0xf]
    %v391 = vunpack.c.l.b16 %v359
    %v392 = vunpack.c.l.b16 %v360
    %v393 = vunpack.c.l.b16 %v361
    %v394 = vunpack.c.l.b16 %v362
    %v395 = vunpack.c.l.b16 %v363
    %v396 = vunpack.c.l.b16 %v364
    %v397 = vunpack.c.l.b16 %v365
    %v398 = vunpack.c.l.b16 %v366
    %v399 = vunpack.c.l.b16 %v367
    %v400 = vunpack.c.l.b16 %v368
    %v401 = vunpack.c.l.b16 %v369
    %v402 = vunpack.c.l.b16 %v370
    %v403 = vunpack.c.l.b16 %v371
    %v404 = vunpack.c.l.b16 %v372
    %v405 = vunpack.c.l.b16 %v373
    %v406 = vunpack.c.l.b16 %v374
    %v407 = vpack.c.b16 %v392, %v391
    %v408 = vpack.c.b16 %v394, %v393
    %v409 = vpack.c.b16 %v396, %v395
    %v410 = vpack.c.b16 %v398, %v397
    %v411 = vpack.c.b16 %v400, %v399
    %v412 = vpack.c.b16 %v402, %v401
    %v413 = vpack.c.b16 %v404, %v403
    %v414 = vpack.c.b16 %v406, %v405
    %423 = vmatprep.subr.bf16.mxu0 0
    %424 = vmatpush1.bf16.msra.mxu0 %v414
    %425 = vmatprep.subr.bf16.mxu0 0
    %426 = vmatpush1.bf16.msra.mxu0 %v413
    %427 = vmatprep.subr.bf16.mxu0 0
    %428 = vmatpush1.bf16.msra.mxu0 %v412
    %429 = vmatprep.subr.bf16.mxu0 0
    %430 = vmatpush1.bf16.msra.mxu0 %v411
    %431 = vmatprep.subr.bf16.mxu0 0
    %432 = vmatpush1.bf16.msra.mxu0 %v410
    %433 = vmatprep.subr.bf16.mxu0 0
    %434 = vmatpush1.bf16.msra.mxu0 %v409
    %435 = vmatprep.subr.bf16.mxu0 0
    %436 = vmatpush1.bf16.msra.mxu0 %v408
    %437 = vmatprep.subr.bf16.mxu0 0
    %438 = vmatpush1.bf16.msra.mxu0 %v407
    %439 = vmatprep.subr.bf16.mxu0 0
    %440 = vmatpush2.bf16.msra.mxu0 0
    %441 = vmatprep.subr.bf16.mxu0 0
    %442 = vmatpush2.bf16.msra.mxu0 0
    %443 = vmatprep.subr.bf16.mxu0 0
    %444 = vmatpush2.bf16.msra.mxu0 0
    %445 = vmatprep.subr.bf16.mxu0 0
    %446 = vmatpush2.bf16.msra.mxu0 0
    %447 = vmatprep.subr.bf16.mxu0 0
    %448 = vmatpush2.bf16.msra.mxu0 0
    %449 = vmatprep.subr.bf16.mxu0 0
    %450 = vmatpush2.bf16.msra.mxu0 0
    %451 = vmatprep.subr.bf16.mxu0 0
    %452 = vmatpush2.bf16.msra.mxu0 0
    %453 = vmatprep.subr.bf16.mxu0 0
    %454 = vmatpush2.bf16.msra.mxu0 0
    %455 = vmatprep.mubr.bf16.mxu0 0
    %456 = vmatmul.mubr.bf16.gmra.mxu0 %v351
    %v457 = vpop.f32.mrf.mxu0
    %v458 = vadd.f32 0.0, %v457
    %v459 = vpop.f32.mrf.mxu0
    %v460 = vpop.f32.mrf.mxu0
    %v461 = vadd.f32 0.0, %v460
    %v462 = vpop.f32.mrf.mxu0
    %463 = vmatprep.mubr.bf16.mxu0 0
    %464 = vmatmul.mubr.bf16.gmra.mxu0 %v352
    %v465 = vpop.f32.mrf.mxu0
    %v466 = vadd.f32 0.0, %v465
    %v467 = vpop.f32.mrf.mxu0
    %v468 = vpop.f32.mrf.mxu0
    %v469 = vadd.f32 0.0, %v468
    %v470 = vpop.f32.mrf.mxu0
    %471 = vmatprep.mubr.bf16.mxu0 0
    %472 = vmatmul.mubr.bf16.gmra.mxu0 %v353
    %v473 = vpop.f32.mrf.mxu0
    %v474 = vadd.f32 0.0, %v473
    %v475 = vpop.f32.mrf.mxu0
    %v476 = vpop.f32.mrf.mxu0
    %v477 = vadd.f32 0.0, %v476
    %v478 = vpop.f32.mrf.mxu0
    %479 = vmatprep.mubr.bf16.mxu0 0
    %480 = vmatmul.mubr.bf16.gmra.mxu0 %v354
    %v481 = vpop.f32.mrf.mxu0
    %v482 = vadd.f32 0.0, %v481
    %v483 = vpop.f32.mrf.mxu0
    %v484 = vpop.f32.mrf.mxu0
    %v485 = vadd.f32 0.0, %v484
    %v486 = vpop.f32.mrf.mxu0
    %487 = vmatprep.mubr.bf16.mxu0 0
    %488 = vmatmul.mubr.bf16.gmra.mxu0 %v355
    %v489 = vpop.f32.mrf.mxu0
    %v490 = vadd.f32 0.0, %v489
    %v491 = vpop.f32.mrf.mxu0
    %v492 = vpop.f32.mrf.mxu0
    %v493 = vadd.f32 0.0, %v492
    %v494 = vpop.f32.mrf.mxu0
    %495 = vmatprep.mubr.bf16.mxu0 0
    %496 = vmatmul.mubr.bf16.gmra.mxu0 %v356
    %v497 = vpop.f32.mrf.mxu0
    %v498 = vadd.f32 0.0, %v497
    %v499 = vpop.f32.mrf.mxu0
    %v500 = vpop.f32.mrf.mxu0
    %v501 = vadd.f32 0.0, %v500
    %v502 = vpop.f32.mrf.mxu0
    %503 = vmatprep.mubr.bf16.mxu0 0
    %504 = vmatmul.mubr.bf16.gmra.mxu0 %v357
    %v505 = vpop.f32.mrf.mxu0
    %v506 = vadd.f32 0.0, %v505
    %v507 = vpop.f32.mrf.mxu0
    %v508 = vpop.f32.mrf.mxu0
    %v509 = vadd.f32 0.0, %v508
    %v510 = vpop.f32.mrf.mxu0
    %511 = vmatprep.mubr.bf16.mxu0 0
    %512 = vmatmul.mubr.bf16.gmra.mxu0 %v358
    %v513 = vpop.f32.mrf.mxu0
    %v514 = vadd.f32 0.0, %v513
    %v515 = vpop.f32.mrf.mxu0
    %v516 = vpop.f32.mrf.mxu0
    %v517 = vadd.f32 0.0, %v516
    %v518 = vpop.f32.mrf.mxu0
    %519 = vdwg.mxu0
    %v520 = vpack.c.bf16 %v461, %v458
    %v521 = vpack.c.bf16 %v469, %v466
    %v522 = vpack.c.bf16 %v477, %v474
    %v523 = vpack.c.bf16 %v485, %v482
    %v524 = vpack.c.bf16 %v493, %v490
    %v525 = vpack.c.bf16 %v501, %v498
    %v526 = vpack.c.bf16 %v509, %v506
    %v527 = vpack.c.bf16 %v517, %v514
    %v536 = vunpack.c.l.b16 %v520
    %v537 = vunpack.c.h.b16 %v520
    %v538 = vunpack.c.l.b16 %v521
    %v539 = vunpack.c.h.b16 %v521
    %v540 = vunpack.c.l.b16 %v522
    %v541 = vunpack.c.h.b16 %v522
    %v542 = vunpack.c.l.b16 %v523
    %v543 = vunpack.c.h.b16 %v523
    %v544 = vunpack.c.l.b16 %v524
    %v545 = vunpack.c.h.b16 %v524
    %v546 = vunpack.c.l.b16 %v525
    %v547 = vunpack.c.h.b16 %v525
    %v548 = vunpack.c.l.b16 %v526
    %v549 = vunpack.c.h.b16 %v526
    %v550 = vunpack.c.l.b16 %v527
    %v551 = vunpack.c.h.b16 %v527
    %v552 = vpack.c.b16 %v536, %v536
    %v553 = vpack.c.b16 %v537, %v537
    %v554 = vpack.c.b16 %v538, %v538
    %v555 = vpack.c.b16 %v539, %v539
    %v556 = vpack.c.b16 %v540, %v540
    %v557 = vpack.c.b16 %v541, %v541
    %v558 = vpack.c.b16 %v542, %v542
    %v559 = vpack.c.b16 %v543, %v543
    %v560 = vpack.c.b16 %v544, %v544
    %v561 = vpack.c.b16 %v545, %v545
    %v562 = vpack.c.b16 %v546, %v546
    %v563 = vpack.c.b16 %v547, %v547
    %v564 = vpack.c.b16 %v548, %v548
    %v565 = vpack.c.b16 %v549, %v549
    %v566 = vpack.c.b16 %v550, %v550
    %v567 = vpack.c.b16 %v551, %v551
    %584 = vst [vmem:[#allocation2] sm:$0xf] %v552
    %585 = vst [vmem:[#allocation2 + $0x4] sm:$0xf] %v553
    %586 = vst [vmem:[#allocation2 + $0x8] sm:$0xf] %v554
    %587 = vst [vmem:[#allocation2 + $0xc] sm:$0xf] %v555
    %588 = vst [vmem:[#allocation2 + $0x10] sm:$0xf] %v556
    %589 = vst [vmem:[#allocation2 + $0x14] sm:$0xf] %v557
    %590 = vst [vmem:[#allocation2 + $0x18] sm:$0xf] %v558
    %591 = vst [vmem:[#allocation2 + $0x1c] sm:$0xf] %v559
    %592 = vst [vmem:[#allocation2 + $0x20] sm:$0xf] %v560
    %593 = vst [vmem:[#allocation2 + $0x24] sm:$0xf] %v561
    %594 = vst [vmem:[#allocation2 + $0x28] sm:$0xf] %v562
    %595 = vst [vmem:[#allocation2 + $0x2c] sm:$0xf] %v563
    %596 = vst [vmem:[#allocation2 + $0x30] sm:$0xf] %v564
    %597 = vst [vmem:[#allocation2 + $0x34] sm:$0xf] %v565
    %598 = vst [vmem:[#allocation2 + $0x38] sm:$0xf] %v566
    %599 = vst [vmem:[#allocation2 + $0x3c] sm:$0xf] %v567
    // Predicated region
    $region10: #{tpu_custom_call.1} parent=1 // pred_check
      _
    $region11: #{tpu_custom_call.1} parent=1 // pred_check_branch
      %601 = sbr.rel (0) target = $region13
    $region12: #{tpu_custom_call.1} parent=1 // pred_region
      %s603 = ssub.s32 1024, 1024
      %604 = vsyncadd [#allocation3], %s603
      %s605 = sshll.u32 [#allocation2], 4
      %s606 = int_to_ptr.vmem [resolvable:$true] %s605
      %611 = dma.vmem_to_hbm [thread:$0]  %s606, 1024, %s2, [#allocation3], 64, 64, 4
    $region13: #{tpu_custom_call.1} parent=1 // pred_fallthru
      _
    // Predicated region
    $region14: #{tpu_custom_call.1} parent=1 // pred_check
      _
    $region15: #{tpu_custom_call.1} parent=1 // pred_check_branch
      %613 = sbr.rel (0) target = $region17
    $region16: #{tpu_custom_call.1} parent=1 // pred_region
      %614 = dma.done [#allocation3], 1024
    $region17: #{tpu_custom_call.1} parent=1 // pred_fallthru
      _
    %615 = vsyncpa [#allocation3], 1

</llo_original>
